<compile_context>
chip_gen: v5e
topology: v5e:2x2
jax: 0.10.0
libtpu: 0.0.40
codegen_flags: <defaults>
</compile_context>

<pallas_src>
import jax
import jax.numpy as jnp
from jax.experimental import pallas as pl
from jax.experimental.pallas import tpu as pltpu


def _round_up(x, m):
    return ((x + m - 1) // m) * m


def gru_cell_kernel(x_ref, h_ref, wih_ref, whh_ref, bi_ref, bh_ref, out_ref):
    """One batch tile of a GRUCell.  Gate math in f32, MXU operands bf16.

    Weights are packed so the three gates occupy contiguous columns
    [0:H]=r, [H:2H]=z, [2H:3H]=n of a single 128-lane-padded block.
    """
    H = out_ref.shape[-1]
    cdt = wih_ref.dtype

    h_f32 = h_ref[...]                      # (tb, H)  f32 — used for the blend
    x = x_ref[...].astype(cdt)              # (tb, K)  bf16 (MXU operand)
    h = h_f32.astype(cdt)                   # (tb, H)  bf16 (MXU operand)

    # (tb, Gp) gate pre-activations, f32 accumulation on the MXU.
    #   bi holds (bir+bhr, biz+bhz, bin) per gate column; bh holds bhn only on
    #   the n columns (it must stay on the gh side because r multiplies it).
    gi = jnp.dot(x, wih_ref[...], preferred_element_type=jnp.float32) + bi_ref[...]
    gh = jnp.dot(h, whh_ref[...], preferred_element_type=jnp.float32) + bh_ref[...]

    # One sigmoid pass over the packed block covers both r and z lanes
    # (n / padding lanes of `a` are computed but never used).
    a = jax.nn.sigmoid(gi + gh)             # (tb, Gp)
    r = a[:, 0:H]                           # (tb, H)
    z = a[:, H:2 * H]                       # (tb, H)
    n = jnp.tanh(gi[:, 2 * H:3 * H] + r * gh[:, 2 * H:3 * H])

    out_ref[...] = ((1.0 - z) * n + z * h_f32).astype(out_ref.dtype)


def pack_gru_params(w_ih_t, w_hh_t, b_ih, b_hh, ngh_dim,
                    compute_dtype=jnp.bfloat16):
    """Pack torch-GRUCell-style params into the kernel's packed lane layout.

    w_ih_t: (input_dim, 3*H)  (transposed torch weight_ih, gate order r,z,n)
    w_hh_t: (H,         3*H)  (transposed torch weight_hh)
    b_ih, b_hh: (3*H,)
    Returns bf16 weights of shape (input_dim, Gp) / (H, Gp) with the three
    gates at contiguous columns [0:3H] and Gp = round_up(3H, 128), plus f32
    bias rows (1, Gp):
      bi = [bir+bhr | biz+bhz | bin | 0]   (added to gi)
      bh = [   0    |    0    | bhn | 0]   (added to gh; r multiplies it)
    """
    K = w_ih_t.shape[0]
    H = ngh_dim
    Gp = _round_up(3 * H, 128)

    w_ih_p = jnp.zeros((K, Gp), jnp.float32).at[:, :3 * H].set(w_ih_t)
    w_hh_p = jnp.zeros((H, Gp), jnp.float32).at[:, :3 * H].set(w_hh_t)
    w_ih_p = w_ih_p.astype(compute_dtype)
    w_hh_p = w_hh_p.astype(compute_dtype)

    bi = jnp.zeros((1, Gp), jnp.float32)
    bi = bi.at[0, 0:2 * H].set(b_ih[0:2 * H] + b_hh[0:2 * H])   # r, z combined
    bi = bi.at[0, 2 * H:3 * H].set(b_ih[2 * H:3 * H])           # n (input bias)
    bh = jnp.zeros((1, Gp), jnp.float32)
    bh = bh.at[0, 2 * H:3 * H].set(b_hh[2 * H:3 * H])           # n (hidden bias)
    return w_ih_p, w_hh_p, bi, bh


def feature_encoder_gru(x, h, w_ih_p, w_hh_p, bi, bh, *, ngh_dim,
                        use_dropout=False, max_single_tile=2048, tile_b=1024):
    """Pallas wrapper matching FeatureEncoderGRU.forward (eval path).

    x: (B, input_dim) f32, h: (B, ngh_dim) f32; packed params from
    pack_gru_params().  Returns (B, ngh_dim) f32.
    """
    # TODO(synk): dropout path (use_dropout=True) not fused into the kernel;
    # the module's forward default is use_dropout=False, so eval semantics are
    # exact.  Implement with pltpu.prng_seed + prng_random_bits if needed.
    assert not use_dropout, "dropout path not implemented in the Pallas kernel"

    B, K = x.shape
    H = ngh_dim
    Gp = w_ih_p.shape[-1]

    if B <= max_single_tile:
        # Single grid step, no padding, no wrapper-side copies at all.
        grid = (1,)
        tb = B
        Bp = B
        x_in, h_in = x, h
    else:
        # Tile the batch with minimal padding; each step gets a full-size tile
        # so megacore sharding on v7x is worthwhile.
        nt = pl.cdiv(B, tile_b)
        tb = _round_up(pl.cdiv(B, nt), 8)
        Bp = nt * tb
        x_in = jnp.pad(x, ((0, Bp - B), (0, 0)))
        h_in = jnp.pad(h, ((0, Bp - B), (0, 0)))
        grid = (nt,)

    sem = ("arbitrary",) if grid[0] == 1 else ("parallel",)

    # Advisory cost estimate for the XLA scheduler.
    flops = 2 * Bp * (K + H) * Gp
    transcendentals = Bp * (Gp + H)            # one sigmoid pass + one tanh pass
    bytes_accessed = (
        Bp * K * 4 + Bp * H * 4                # x, h in (f32)
        + K * Gp * 2 + H * Gp * 2              # bf16 weights
        + 2 * Gp * 4                           # biases
        + Bp * H * 4                           # out (f32)
    )

    out = pl.pallas_call(
        gru_cell_kernel,
        out_shape=jax.ShapeDtypeStruct((Bp, H), jnp.float32),
        grid=grid,
        in_specs=[
            pl.BlockSpec((tb, K), lambda i: (i, 0)),    # x tile (full lane dim)
            pl.BlockSpec((tb, H), lambda i: (i, 0)),    # h tile (full lane dim)
            pl.BlockSpec((K, Gp), lambda i: (0, 0)),    # w_ih (VMEM-resident)
            pl.BlockSpec((H, Gp), lambda i: (0, 0)),    # w_hh (VMEM-resident)
            pl.BlockSpec((1, Gp), lambda i: (0, 0)),    # bias on gi
            pl.BlockSpec((1, Gp), lambda i: (0, 0)),    # bias on gh (n gate)
        ],
        out_specs=pl.BlockSpec((tb, H), lambda i: (i, 0)),
        compiler_params=pltpu.CompilerParams(
            dimension_semantics=sem,
            vmem_limit_bytes=32 * 1024 * 1024,
        ),
        cost_estimate=pl.CostEstimate(
            flops=flops,
            transcendentals=transcendentals,
            bytes_accessed=bytes_accessed,
        ),
    )(x_in, h_in, w_ih_p, w_hh_p, bi, bh)

    return out if Bp == B else out[:B]


def reference_gru(x, h, w_ih_t, w_hh_t, b_ih, b_hh):
    """Plain f32 JAX reference with torch.nn.GRUCell semantics."""
    H = h.shape[-1]
    gi = x @ w_ih_t + b_ih[None, :]
    gh = h @ w_hh_t + b_hh[None, :]
    r = jax.nn.sigmoid(gi[:, :H] + gh[:, :H])
    z = jax.nn.sigmoid(gi[:, H:2 * H] + gh[:, H:2 * H])
    n = jnp.tanh(gi[:, 2 * H:] + r * gh[:, 2 * H:])
    return (1.0 - z) * n + z * h


if __name__ == "__main__":
    input_dim, ngh_dim = 16, 32

    key = jax.random.PRNGKey(0)
    kx, kh, k1, k2, k3, k4, kx2, kh2 = jax.random.split(key, 8)

    # Synthetic parameters, torch GRUCell-like init scale, already transposed
    # to (in, 3H) layout; gate order r, z, n.
    bound = 1.0 / (ngh_dim ** 0.5)
    w_ih_t = jax.random.uniform(k1, (input_dim, 3 * ngh_dim), jnp.float32, -bound, bound)
    w_hh_t = jax.random.uniform(k2, (ngh_dim, 3 * ngh_dim), jnp.float32, -bound, bound)
    b_ih = jax.random.uniform(k3, (3 * ngh_dim,), jnp.float32, -bound, bound)
    b_hh = jax.random.uniform(k4, (3 * ngh_dim,), jnp.float32, -bound, bound)

    w_ih_p, w_hh_p, bi, bh = pack_gru_params(w_ih_t, w_hh_t, b_ih, b_hh, ngh_dim)

    # --- small batch: single grid step, zero wrapper copies ---
    B = 8
    x = jax.random.normal(kx, (B, input_dim), jnp.float32)
    h = jax.random.normal(kh, (B, ngh_dim), jnp.float32)
    out = feature_encoder_gru(x, h, w_ih_p, w_hh_p, bi, bh, ngh_dim=ngh_dim)
    out = jax.block_until_ready(out)
    ref = reference_gru(x, h, w_ih_t, w_hh_t, b_ih, b_hh)
    assert out.shape == (B, ngh_dim)
    # bf16 MXU operands -> loosened tolerance vs the f32 reference.
    assert jnp.allclose(out, ref, atol=2e-2, rtol=2e-2), float(jnp.max(jnp.abs(out - ref)))

    # --- larger batch, still a single full-size grid step (no padding) ---
    B2 = 300
    x2 = jax.random.normal(kx2, (B2, input_dim), jnp.float32)
    h2 = jax.random.normal(kh2, (B2, ngh_dim), jnp.float32)
    out2 = feature_encoder_gru(x2, h2, w_ih_p, w_hh_p, bi, bh, ngh_dim=ngh_dim)
    out2 = jax.block_until_ready(out2)
    ref2 = reference_gru(x2, h2, w_ih_t, w_hh_t, b_ih, b_hh)
    assert out2.shape == (B2, ngh_dim)
    assert jnp.allclose(out2, ref2, atol=2e-2, rtol=2e-2), float(jnp.max(jnp.abs(out2 - ref2)))

    # --- exercise the tiled (large-B) path with small shapes by lowering the
    #     single-tile threshold: grid=(5,), tb=64, minimal padding (300->320) ---
    out3 = feature_encoder_gru(x2, h2, w_ih_p, w_hh_p, bi, bh, ngh_dim=ngh_dim,
                               max_single_tile=64, tile_b=64)
    out3 = jax.block_until_ready(out3)
    assert out3.shape == (B2, ngh_dim)
    assert jnp.allclose(out3, ref2, atol=2e-2, rtol=2e-2), float(jnp.max(jnp.abs(out3 - ref2)))

    print("KERNEL_OK")
</pallas_src>

<mosaic_0001>
module attributes {stable_mosaic.version = 11 : i64} {
  func.func @gru_cell_kernel(%arg0: i32, %arg1: memref<8x16xf32, #tpu.memory_space<vmem>>, %arg2: memref<8x32xf32, #tpu.memory_space<vmem>>, %arg3: memref<16x128xbf16, #tpu.memory_space<vmem>>, %arg4: memref<32x128xbf16, #tpu.memory_space<vmem>>, %arg5: memref<1x128xf32, #tpu.memory_space<vmem>>, %arg6: memref<1x128xf32, #tpu.memory_space<vmem>>, %arg7: memref<8x32xf32, #tpu.memory_space<vmem>>) attributes {dimension_semantics = [#tpu.dimension_semantics<arbitrary>], iteration_bounds = array<i64: 1>, scalar_prefetch = 0 : i64, scratch_operands = 0 : i64, tpu.core_type = #tpu.core_type<tc>, window_params = [{transform_indices = @transform_0, window_bounds = array<i64: 8, 16>}, {transform_indices = @transform_1, window_bounds = array<i64: 8, 32>}, {pipeline_mode = #tpu.pipeline_mode<synchronous>, transform_indices = @transform_2, window_bounds = array<i64: 16, 128>}, {pipeline_mode = #tpu.pipeline_mode<synchronous>, transform_indices = @transform_3, window_bounds = array<i64: 32, 128>}, {pipeline_mode = #tpu.pipeline_mode<synchronous>, transform_indices = @transform_4, window_bounds = array<i64: 1, 128>}, {pipeline_mode = #tpu.pipeline_mode<synchronous>, transform_indices = @transform_5, window_bounds = array<i64: 1, 128>}, {transform_indices = @transform_6, window_bounds = array<i64: 8, 32>}]} {
    %c0 = arith.constant 0 : index
    %c0_0 = arith.constant 0 : index
    %0 = vector.load %arg2[%c0, %c0_0] : memref<8x32xf32, #tpu.memory_space<vmem>>, vector<8x32xf32>
    %c0_1 = arith.constant 0 : index
    %c0_2 = arith.constant 0 : index
    %1 = vector.load %arg1[%c0_1, %c0_2] : memref<8x16xf32, #tpu.memory_space<vmem>>, vector<8x16xf32>
    %2 = arith.truncf %1 : vector<8x16xf32> to vector<8x16xbf16>
    %3 = arith.truncf %0 : vector<8x32xf32> to vector<8x32xbf16>
    %c0_3 = arith.constant 0 : index
    %c0_4 = arith.constant 0 : index
    %4 = vector.load %arg3[%c0_3, %c0_4] : memref<16x128xbf16, #tpu.memory_space<vmem>>, vector<16x128xbf16>
    %cst = arith.constant dense<0.000000e+00> : vector<8x128xf32>
    %5 = tpu.matmul %2, %4, %cst {dimension_numbers = #tpu.dot_dimension_numbers<[1], [0], [0], [1], [0, 0, 1, 1], [], []>} : vector<8x16xbf16>, vector<16x128xbf16>, vector<8x128xf32> -> vector<8x128xf32>
    %c0_5 = arith.constant 0 : index
    %c0_6 = arith.constant 0 : index
    %6 = vector.load %arg5[%c0_5, %c0_6] : memref<1x128xf32, #tpu.memory_space<vmem>>, vector<1x128xf32>
    %7 = vector.broadcast %6 : vector<1x128xf32> to vector<8x128xf32>
    %8 = arith.addf %5, %7 : vector<8x128xf32>
    %c0_7 = arith.constant 0 : index
    %c0_8 = arith.constant 0 : index
    %9 = vector.load %arg4[%c0_7, %c0_8] : memref<32x128xbf16, #tpu.memory_space<vmem>>, vector<32x128xbf16>
    %cst_9 = arith.constant dense<0.000000e+00> : vector<8x128xf32>
    %10 = tpu.matmul %3, %9, %cst_9 {dimension_numbers = #tpu.dot_dimension_numbers<[1], [0], [0], [1], [0, 0, 1, 1], [], []>} : vector<8x32xbf16>, vector<32x128xbf16>, vector<8x128xf32> -> vector<8x128xf32>
    %c0_10 = arith.constant 0 : index
    %c0_11 = arith.constant 0 : index
    %11 = vector.load %arg6[%c0_10, %c0_11] : memref<1x128xf32, #tpu.memory_space<vmem>>, vector<1x128xf32>
    %12 = vector.broadcast %11 : vector<1x128xf32> to vector<8x128xf32>
    %13 = arith.addf %10, %12 : vector<8x128xf32>
    %14 = arith.addf %8, %13 : vector<8x128xf32>
    %15 = arith.negf %14 : vector<8x128xf32>
    %16 = math.exp %15 : vector<8x128xf32>
    %cst_12 = arith.constant 1.000000e+00 : f32
    %17 = vector.broadcast %cst_12 : f32 to vector<8x128xf32>
    %18 = arith.addf %17, %16 : vector<8x128xf32>
    %19 = arith.divf %17, %18 : vector<8x128xf32>
    %20 = vector.extract_strided_slice %19 {offsets = [0, 0], sizes = [8, 32], strides = [1, 1]} : vector<8x128xf32> to vector<8x32xf32>
    %21 = vector.extract_strided_slice %19 {offsets = [0, 32], sizes = [8, 32], strides = [1, 1]} : vector<8x128xf32> to vector<8x32xf32>
    %22 = vector.extract_strided_slice %8 {offsets = [0, 64], sizes = [8, 32], strides = [1, 1]} : vector<8x128xf32> to vector<8x32xf32>
    %23 = vector.extract_strided_slice %13 {offsets = [0, 64], sizes = [8, 32], strides = [1, 1]} : vector<8x128xf32> to vector<8x32xf32>
    %24 = arith.mulf %20, %23 : vector<8x32xf32>
    %25 = arith.addf %22, %24 : vector<8x32xf32>
    %26 = math.tanh %25 : vector<8x32xf32>
    %cst_13 = arith.constant 1.000000e+00 : f32
    %27 = vector.broadcast %cst_13 : f32 to vector<8x32xf32>
    %28 = arith.subf %27, %21 : vector<8x32xf32>
    %29 = arith.mulf %28, %26 : vector<8x32xf32>
    %30 = arith.mulf %21, %0 : vector<8x32xf32>
    %31 = arith.addf %29, %30 : vector<8x32xf32>
    %c0_14 = arith.constant 0 : index
    %c0_15 = arith.constant 0 : index
    %32 = vector.load %arg7[%c0_14, %c0_15] : memref<8x32xf32, #tpu.memory_space<vmem>>, vector<8x32xf32>
    tpu.vector_store %arg7[%c0_14, %c0_15], %31 {strides = array<i32>} : memref<8x32xf32, #tpu.memory_space<vmem>>, vector<8x32xf32>,
    return
  }
  func.func @transform_0(%arg0: i32) -> (i32, i32) {
    %c0_i32 = arith.constant 0 : i32
    %c0_i32_0 = arith.constant 0 : i32
    return %arg0, %c0_i32 : i32, i32
  }
  func.func @transform_1(%arg0: i32) -> (i32, i32) {
    %c0_i32 = arith.constant 0 : i32
    %c0_i32_0 = arith.constant 0 : i32
    return %arg0, %c0_i32 : i32, i32
  }
  func.func @transform_2(%arg0: i32) -> (i32, i32) {
    %c0_i32 = arith.constant 0 : i32
    %c0_i32_0 = arith.constant 0 : i32
    %c0_i32_1 = arith.constant 0 : i32
    return %c0_i32, %c0_i32_0 : i32, i32
  }
  func.func @transform_3(%arg0: i32) -> (i32, i32) {
    %c0_i32 = arith.constant 0 : i32
    %c0_i32_0 = arith.constant 0 : i32
    %c0_i32_1 = arith.constant 0 : i32
    return %c0_i32, %c0_i32_0 : i32, i32
  }
  func.func @transform_4(%arg0: i32) -> (i32, i32) {
    %c0_i32 = arith.constant 0 : i32
    %c0_i32_0 = arith.constant 0 : i32
    %c0_i32_1 = arith.constant 0 : i32
    return %c0_i32, %c0_i32_0 : i32, i32
  }
  func.func @transform_5(%arg0: i32) -> (i32, i32) {
    %c0_i32 = arith.constant 0 : i32
    %c0_i32_0 = arith.constant 0 : i32
    %c0_i32_1 = arith.constant 0 : i32
    return %c0_i32, %c0_i32_0 : i32, i32
  }
  func.func @transform_6(%arg0: i32) -> (i32, i32) {
    %c0_i32 = arith.constant 0 : i32
    %c0_i32_0 = arith.constant 0 : i32
    return %arg0, %c0_i32 : i32, i32
  }
}

</mosaic_0001>

<llo_original>
// kernel: tpu_custom_call.1
$region0: #{tpu_custom_call.1}
  #allocation0 [shape = 'u32[]', space=smem, size = 0x4, offset = 0x4, fixed_abs, tag = 'smem constant byte address 0x4 - core index']
  #allocation1 [shape = 'u32[72,128]{1,0:T(1,128)}', space=vmem, size = 0x9000, scoped, tag = 'internal scratch']
  %s0 = inlined_call_operand.hbm [shape: f32[8,16], index: 0, kind: input, shape index: {}]
  %s1 = inlined_call_operand.hbm [shape: f32[8,32], index: 1, kind: input, shape index: {}]
  %s2 = inlined_call_operand.hbm [shape: bf16[16,128], index: 2, kind: input, shape index: {}]
  %s3 = inlined_call_operand.hbm [shape: bf16[32,128], index: 3, kind: input, shape index: {}]
  %s4 = inlined_call_operand.vmem [shape: f32[1,128], index: 4, kind: input, shape index: {}]
  %s5 = inlined_call_operand.vmem [shape: f32[1,128], index: 5, kind: input, shape index: {}]
  %s6 = inlined_call_operand.hbm [shape: f32[8,32], index: 6, kind: output, shape index: {}]
  %s7 = sld [smem:[#allocation0]]
  $region50: #{tpu_custom_call.1} parent=0
    _
  %s9 = ssub.s32 1, %s7
  %s10 = scalar_select 0, %s9, %s7
  $region1: #{tpu_custom_call.1} parent=0
    #allocation2 [shape = 'u8[4096]{0}', space=vmem, size = 0x1000, scoped, tag = 'input window, operand 0, single buffered']
    #allocation3 [shape = 's32[1]{0}', space=sflag, size = 0x4, scoped, tag = 'scoped memory for tpu_custom_call.1']
    #allocation4 [shape = 's32[1]{0}', space=sflag, size = 0x4, scoped, tag = 'scoped memory for tpu_custom_call.1']
    #allocation5 [shape = 'u8[4096]{0}', space=vmem, size = 0x1000, scoped, tag = 'input window, operand 1, single buffered']
    #allocation6 [shape = 's32[1]{0}', space=sflag, size = 0x4, scoped, tag = 'scoped memory for tpu_custom_call.1']
    #allocation7 [shape = 'u8[4096]{0}', space=vmem, size = 0x1000, scoped, tag = 'input window, operand 2, single buffered']
    #allocation8 [shape = 'u8[8192]{0}', space=vmem, size = 0x2000, scoped, tag = 'input window, operand 3, single buffered']
    #allocation9 [shape = 's32[1]{0}', space=sflag, size = 0x4, scoped, tag = 'scoped memory for tpu_custom_call.1']
    #allocation10 [shape = 'u8[4096]{0}', space=vmem, size = 0x1000, scoped, tag = 'output window, operand 0, single buffered']
    %11 = vsyncpa [#allocation3], 0
    %12 = vsyncpa [#allocation6], 0
    %13 = vsyncpa [#allocation9], 0
    %14 = vsyncpa [#allocation4], 0
    // Predicated region
    $region2: #{tpu_custom_call.1} parent=1 // pred_check
      _
    $region3: #{tpu_custom_call.1} parent=1 // pred_check_branch
      %16 = sbr.rel (0) target = $region5
    $region4: #{tpu_custom_call.1} parent=1 // pred_region
      %18 = vsyncadd [#allocation3], 0
      %s20 = sshll.u32 %s0, 4
      %s21 = int_to_ptr.hbm [resolvable:$true] %s20
      %s22 = sshll.u32 [#allocation2], 4
      %s23 = int_to_ptr.vmem [resolvable:$true] %s22
      %25 = dma.hbm_to_vmem [thread:$0]  %s21, 128, %s23, [#allocation3]
    $region5: #{tpu_custom_call.1} parent=1 // pred_fallthru
      _
    // Predicated region
    $region6: #{tpu_custom_call.1} parent=1 // pred_check
      _
    $region7: #{tpu_custom_call.1} parent=1 // pred_check_branch
      %27 = sbr.rel (0) target = $region9
    $region8: #{tpu_custom_call.1} parent=1 // pred_region
      %29 = vsyncadd [#allocation6], 0
      %s31 = sshll.u32 %s1, 4
      %s32 = int_to_ptr.hbm [resolvable:$true] %s31
      %s33 = sshll.u32 [#allocation5], 4
      %s34 = int_to_ptr.vmem [resolvable:$true] %s33
      %36 = dma.hbm_to_vmem [thread:$0]  %s32, 128, %s34, [#allocation6]
    $region9: #{tpu_custom_call.1} parent=1 // pred_fallthru
      _
    // Predicated region
    $region10: #{tpu_custom_call.1} parent=1 // pred_check
      _
    $region11: #{tpu_custom_call.1} parent=1 // pred_check_branch
      %38 = sbr.rel (0) target = $region13
    $region12: #{tpu_custom_call.1} parent=1 // pred_region
      %40 = vsyncadd [#allocation6], 0
      %s41 = sshll.u32 %s2, 4
      %s42 = int_to_ptr.hbm [resolvable:$true] %s41
      %s43 = sshll.u32 [#allocation7], 4
      %s44 = int_to_ptr.vmem [resolvable:$true] %s43
      %49 = dma.hbm_to_vmem [thread:$0]  %s42, 128, %s44, [#allocation6], 64, 64, 4
    $region13: #{tpu_custom_call.1} parent=1 // pred_fallthru
      _
    // Predicated region
    $region14: #{tpu_custom_call.1} parent=1 // pred_check
      _
    $region15: #{tpu_custom_call.1} parent=1 // pred_check_branch
      %51 = sbr.rel (0) target = $region17
    $region16: #{tpu_custom_call.1} parent=1 // pred_region
      %53 = vsyncadd [#allocation9], 0
      %s54 = sshll.u32 %s3, 4
      %s55 = int_to_ptr.hbm [resolvable:$true] %s54
      %s56 = sshll.u32 [#allocation8], 4
      %s57 = int_to_ptr.vmem [resolvable:$true] %s56
      %62 = dma.hbm_to_vmem [thread:$0]  %s55, 256, %s57, [#allocation9], 64, 64, 4
    $region17: #{tpu_custom_call.1} parent=1 // pred_fallthru
      _
    // Predicated region
    $region18: #{tpu_custom_call.1} parent=1 // pred_check
      _
    $region19: #{tpu_custom_call.1} parent=1 // pred_check_branch
      %64 = sbr.rel (0) target = $region21
    $region20: #{tpu_custom_call.1} parent=1 // pred_region
      _
    $region21: #{tpu_custom_call.1} parent=1 // pred_fallthru
      _
    // Predicated region
    $region22: #{tpu_custom_call.1} parent=1 // pred_check
      _
    $region23: #{tpu_custom_call.1} parent=1 // pred_check_branch
      %66 = sbr.rel (0) target = $region25
    $region24: #{tpu_custom_call.1} parent=1 // pred_region
      _
    $region25: #{tpu_custom_call.1} parent=1 // pred_fallthru
      _
    // Predicated region
    $region26: #{tpu_custom_call.1} parent=1 // pred_check
      _
    $region27: #{tpu_custom_call.1} parent=1 // pred_check_branch
      %68 = sbr.rel (0) target = $region29
    $region28: #{tpu_custom_call.1} parent=1 // pred_region
      %70 = dma.done [#allocation3], 128
    $region29: #{tpu_custom_call.1} parent=1 // pred_fallthru
      _
    // Predicated region
    $region30: #{tpu_custom_call.1} parent=1 // pred_check
      _
    $region31: #{tpu_custom_call.1} parent=1 // pred_check_branch
      %72 = sbr.rel (0) target = $region33
    $region32: #{tpu_custom_call.1} parent=1 // pred_region
      %74 = dma.done [#allocation6], 128
    $region33: #{tpu_custom_call.1} parent=1 // pred_fallthru
      _
    // Predicated region
    $region34: #{tpu_custom_call.1} parent=1 // pred_check
      _
    $region35: #{tpu_custom_call.1} parent=1 // pred_check_branch
      %76 = sbr.rel (0) target = $region37
    $region36: #{tpu_custom_call.1} parent=1 // pred_region
      %78 = dma.done [#allocation6], 128
    $region37: #{tpu_custom_call.1} parent=1 // pred_fallthru
      _
    // Predicated region
    $region38: #{tpu_custom_call.1} parent=1 // pred_check
      _
    $region39: #{tpu_custom_call.1} parent=1 // pred_check_branch
      %80 = sbr.rel (0) target = $region41
    $region40: #{tpu_custom_call.1} parent=1 // pred_region
      %82 = dma.done [#allocation9], 256
    $region41: #{tpu_custom_call.1} parent=1 // pred_fallthru
      _
    %v84 = vld [vmem:[#allocation5] sm:$0xff]
    %v85 = vld [vmem:[#allocation2] sm:$0xff]
    %v86 = vpack.c.bf16 %v85, %v85
    %v87 = vpack.c.bf16 %v84, %v84
    %v88 = vld [vmem:[#allocation7] sm:$0xf]
    %v89 = vld [vmem:[#allocation7 + $0x4] sm:$0xf]
    %v90 = vld [vmem:[%s4] sm:$0x1]
    %v92 = vperm.slane %v90, 0
    %v96 = vunpack.c.l.b16 %v88
    %v97 = vunpack.c.l.b16 %v89
    %v98 = vpack.c.b16 %v97, %v96
    %vm100 = vcmask 130048
    %v102 = vsel %vm100, %v86, 0
    %104 = vmatpush.bf16.msra.mxu0 0
    %105 = vmatpush.bf16.msra.mxu0 0
    %106 = vmatpush.bf16.msra.mxu0 0
    %107 = vmatpush.bf16.msra.mxu0 0
    %108 = vmatpush.bf16.msra.mxu0 0
    %109 = vmatpush.bf16.msra.mxu0 0
    %110 = vmatpush.bf16.msra.mxu0 0
    %111 = vmatpush.bf16.msra.mxu0 %v98
    %112 = vmatmul.bf16.gmra.mxu0 %v102
    %v113 = vpop.f32.mrf.mxu0
    %v114 = vadd.f32 %v92, %v113
    %v115 = vpop.f32.mrf.mxu0
    %116 = vdwg.mxu0
    %v117 = vld [vmem:[#allocation8] sm:$0xf]
    %v118 = vld [vmem:[#allocation8 + $0x4] sm:$0xf]
    %v119 = vld [vmem:[#allocation8 + $0x8] sm:$0xf]
    %v120 = vld [vmem:[#allocation8 + $0xc] sm:$0xf]
    %v121 = vld [vmem:[%s5] sm:$0x1]
    %v123 = vperm.slane %v121, 0
    %v129 = vunpack.c.l.b16 %v117
    %v130 = vunpack.c.l.b16 %v118
    %v131 = vunpack.c.l.b16 %v119
    %v132 = vunpack.c.l.b16 %v120
    %v133 = vpack.c.b16 %v130, %v129
    %v134 = vpack.c.b16 %v132, %v131
    %vm137 = vcmask 261120
    %v139 = vsel %vm137, %v87, 0
    %141 = vmatpush.bf16.msra.mxu0 0
    %142 = vmatpush.bf16.msra.mxu0 0
    %143 = vmatpush.bf16.msra.mxu0 0
    %144 = vmatpush.bf16.msra.mxu0 0
    %145 = vmatpush.bf16.msra.mxu0 0
    %146 = vmatpush.bf16.msra.mxu0 0
    %147 = vmatpush.bf16.msra.mxu0 %v134
    %148 = vmatpush.bf16.msra.mxu0 %v133
    %149 = vmatmul.bf16.gmra.mxu0 %v139
    %v150 = vpop.f32.mrf.mxu0
    %v151 = vadd.f32 %v123, %v150
    %v152 = vpop.f32.mrf.mxu0
    %153 = vdwg.mxu0
    %v154 = vadd.f32 %v114, %v151
    %v155 = vxor.u32 %v154, 2147483648
    %v156 = vmul.f32 %v155, 1.442695
    %v157 = vpow.pop %v156
    %v158 = vadd.f32 %v157, 1.0
    %v159 = vrcp.pop %v158
    %v160 = vmul.f32 %v158, %v159
    %v161 = vsub.f32 1.0, %v160
    %v162 = vmul.f32 %v159, %v161
    %v163 = vadd.f32 %v159, %v162
    %vm164 = vweird.f32 %v158
    %vm165 = vweird.f32 %v159
    %vm166 = vmor %vm164, %vm165
    %v167 = vsel %vm166, %v159, %v163
    %v168 = vand.u32 2147483647, %v158
    %vm169 = vcmp.eq.f32.partialorder %v168, 8.507059e+37
    %v170 = vand.u32 %v158, 2147483648
    %v171 = vor.u32 1.1754944e-38, %v170
    %v172 = vsel %vm169, %v171, %v167
    %v173 = vmul.f32 1.0, %v172
    %175 = vrot.lane.b32.xlu0 %v151, 64
    %v176 = vpop.permute.xlu0 %175
    %v178 = vmul.f32 %v173, %v176
    %180 = vrot.lane.b32.xlu0 %v178, 64
    %v181 = vpop.permute.xlu0 %180
    %v183 = vadd.f32 %v114, %v181
    %v184 = vtanh.pop %v183
    %v185 = vsub.f32 1.0, %v173
    %187 = vrot.lane.b32.xlu0 %v184, 96
    %v188 = vpop.permute.xlu0 %187
    %v190 = vmul.f32 %v185, %v188
    %192 = vrot.lane.b32.xlu0 %v84, 32
    %v193 = vpop.permute.xlu0 %192
    %v195 = vmul.f32 %v173, %v193
    %v196 = vadd.f32 %v190, %v195
    %198 = vrot.lane.b32.xlu0 %v196, 96
    %v199 = vpop.permute.xlu0 %198
    %201 = vst.msk [vmem:[#allocation10] sm:$0xff] %vm137, %v199
    // Predicated region
    $region42: #{tpu_custom_call.1} parent=1 // pred_check
      _
    $region43: #{tpu_custom_call.1} parent=1 // pred_check_branch
      %203 = sbr.rel (0) target = $region45
    $region44: #{tpu_custom_call.1} parent=1 // pred_region
      %205 = vsyncadd [#allocation4], 0
      %s207 = sshll.u32 [#allocation10], 4
      %s208 = int_to_ptr.vmem [resolvable:$true] %s207
      %s209 = sshll.u32 %s6, 4
      %s210 = int_to_ptr.hbm [resolvable:$true] %s209
      %212 = dma.vmem_to_hbm [thread:$0]  %s208, 128, %s210, [#allocation4]
    $region45: #{tpu_custom_call.1} parent=1 // pred_fallthru
      _
    // Predicated region
    $region46: #{tpu_custom_call.1} parent=1 // pred_check
      _
    $region47: #{tpu_custom_call.1} parent=1 // pred_check_branch
      %214 = sbr.rel (0) target = $region49
    $region48: #{tpu_custom_call.1} parent=1 // pred_region
      %216 = dma.done [#allocation4], 128
    $region49: #{tpu_custom_call.1} parent=1 // pred_fallthru
      _
    %217 = vsyncpa [#allocation3], 1
    %218 = vsyncpa [#allocation6], 1
    %219 = vsyncpa [#allocation9], 1
    %220 = vsyncpa [#allocation4], 1

</llo_original>
